<compile_context>
chip_gen: v7x
topology: tpu7x:2x2x1
jax: 0.10.0
libtpu: 0.0.40
codegen_flags: <defaults>
</compile_context>

<pallas_src>
import jax
import jax.numpy as jnp
from jax.experimental import pallas as pl
from jax.experimental.pallas import tpu as pltpu

_LANES = 128
_SUBLANES = 8
_MAX_TILE_ROWS = 8192  # 3 inputs x 2 buffers x (8192*128*4 B) = 24 MiB, v7x-safe


def _linear_loss_kernel(s0_ref, s1_ref, mu_ref, partial_ref):
    """One (tile_rows, 128) tile -> one (1,1) partial sum of per-element BCE."""
    # Load in native dtype, upcast in-register (bf16 inputs halve HBM traffic).
    s0 = s0_ref[...].astype(jnp.float32)
    s1 = s1_ref[...].astype(jnp.float32)
    mu = mu_ref[...].astype(jnp.float32)

    # Probability that score_1 "wins".
    p = s1 / (s0 + s1 + jnp.float32(1e-6))

    # BCE with PyTorch's per-term log clamping at -100.
    # Zero-padded tail elements contribute exactly 0 here (p=0 -> log p is
    # clamped but mu=0; log(1-p)=0), so no validity mask is needed; the
    # wrapper divides by the logical B.
    log_p = jnp.maximum(jnp.log(p), jnp.float32(-100.0))
    log_1mp = jnp.maximum(jnp.log(1.0 - p), jnp.float32(-100.0))
    per_elem = -(mu * log_p + (1.0 - mu) * log_1mp)

    partial_ref[...] = jnp.sum(per_elem, keepdims=True)


def _tile_geometry(batch, tile_rows):
    """Pick (padded_rows, tr) for the (rows, 128) slab.

    Avoids a wrapper-side pad copy whenever `batch` is already (8*128)-aligned
    by choosing a tile that divides the row count exactly, and keeps grid >= 2
    when possible so v7x's two TensorCores both get work.
    """
    max_tr = max(_SUBLANES,
                 (min(tile_rows, _MAX_TILE_ROWS) // _SUBLANES) * _SUBLANES)
    rows_min = pl.cdiv(pl.cdiv(batch, _LANES), _SUBLANES) * _SUBLANES

    # Whole problem fits in one tile: split into >= 2 tiles when possible.
    if rows_min <= max_tr:
        tr = (rows_min // 2 // _SUBLANES) * _SUBLANES
        while tr >= _SUBLANES and rows_min % tr != 0:
            tr -= _SUBLANES
        if tr >= _SUBLANES:
            return rows_min, tr
        return rows_min, rows_min

    # Already slab-aligned: no pad copy at all.  Largest tile (multiple of 8,
    # <= max_tr) that divides the row count exactly.
    if batch == rows_min * _LANES:
        tr = max_tr
        while tr > _SUBLANES and rows_min % tr != 0:
            tr -= _SUBLANES
        if tr >= min(max_tr, 256):
            return rows_min, tr
        # else: pathological row count -- a small pad beats a huge grid.

    # Pad is unavoidable (or preferable): round up to whole tiles.
    return pl.cdiv(rows_min, max_tr) * max_tr, max_tr


def linear_loss(score_0, score_1, mu, *, tile_rows=2048):
    """score_0, score_1: shape (B,) or (B,1); mu: shape (B,). Returns scalar loss."""
    s0 = jnp.ravel(score_0)
    s1 = jnp.ravel(score_1)
    m = jnp.ravel(mu)
    B = s0.shape[0]
    assert s1.shape[0] == B and m.shape[0] == B

    rows, tr = _tile_geometry(B, tile_rows)
    grid = rows // tr
    padded = rows * _LANES

    def _prep(x):
        pad = padded - B
        if pad:
            # Zero padding contributes exactly 0 to the BCE sum (see kernel).
            x = jnp.pad(x, (0, pad))
        return jnp.reshape(x, (rows, _LANES))

    s0_2d, s1_2d, m_2d = _prep(s0), _prep(s1), _prep(m)

    # VMEM budget: 3 inputs x 2 pipeline buffers x tile bytes (f32 worst case),
    # with headroom, capped so a v5e/v6e-sized tile never over-requests on v7x.
    tile_bytes = tr * _LANES * 4
    vmem_limit = int(min(48 * 1024 * 1024,
                         max(8 * 1024 * 1024, 4 * 3 * 2 * tile_bytes)))

    blk = lambda i: (i, 0)
    in_spec = pl.BlockSpec((tr, _LANES), blk)
    partials = pl.pallas_call(
        _linear_loss_kernel,
        out_shape=jax.ShapeDtypeStruct((grid, 1), jnp.float32),
        grid=(grid,),
        in_specs=[in_spec, in_spec, in_spec],
        out_specs=pl.BlockSpec((1, 1), blk),
        compiler_params=pltpu.CompilerParams(
            # Independent per-tile partial sums -> safe to split across
            # TensorCores on v7x; measured impact on single-TC v5e/v6e is ~0.
            dimension_semantics=("parallel",),
            vmem_limit_bytes=vmem_limit,
        ),
    )(s0_2d, s1_2d, m_2d)

    # Tiny final reduction over `grid` partials; divide by the logical B.
    return jnp.sum(partials) / jnp.float32(B)


def _reference(score_0, score_1, mu):
    s0 = jnp.ravel(score_0).astype(jnp.float32)
    s1 = jnp.ravel(score_1).astype(jnp.float32)
    m = jnp.ravel(mu).astype(jnp.float32)
    p = s1 / (s0 + s1 + 1e-6)
    log_p = jnp.maximum(jnp.log(p), -100.0)
    log_1mp = jnp.maximum(jnp.log(1.0 - p), -100.0)
    return jnp.mean(-(m * log_p + (1.0 - m) * log_1mp))


if __name__ == "__main__":
    key = jax.random.PRNGKey(0)

    # B=8: unaligned (padded) path.  B=2048: slab-aligned, no-pad, grid=2 path.
    for B in (8, 2048):
        k0, k1, k2 = jax.random.split(jax.random.fold_in(key, B), 3)
        # Scores are positive (e.g. softplus outputs of the score LSTM head), shape (B, 1)
        score_0 = jax.nn.softplus(jax.random.normal(k0, (B, 1), dtype=jnp.float32))
        score_1 = jax.nn.softplus(jax.random.normal(k1, (B, 1), dtype=jnp.float32))
        # mu: BCE targets in [0, 1], shape (B,)
        mu = jax.random.uniform(k2, (B,), dtype=jnp.float32)

        loss = jax.block_until_ready(linear_loss(score_0, score_1, mu))
        ref = _reference(score_0, score_1, mu)
        assert jnp.allclose(loss, ref, rtol=1e-5, atol=1e-5), (B, loss, ref)

    print("KERNEL_OK")
</pallas_src>

<mosaic_0001>
module attributes {stable_mosaic.version = 11 : i64} {
  func.func @_linear_loss_kernel(%arg0: i32, %arg1: memref<8x128xf32, #tpu.memory_space<vmem>>, %arg2: memref<8x128xf32, #tpu.memory_space<vmem>>, %arg3: memref<8x128xf32, #tpu.memory_space<vmem>>, %arg4: memref<1x1xf32, #tpu.memory_space<vmem>>) attributes {dimension_semantics = [#tpu.dimension_semantics<parallel>], iteration_bounds = array<i64: 1>, scalar_prefetch = 0 : i64, scratch_operands = 0 : i64, tpu.core_type = #tpu.core_type<tc>, window_params = [{transform_indices = @transform_0, window_bounds = array<i64: 8, 128>}, {transform_indices = @transform_1, window_bounds = array<i64: 8, 128>}, {transform_indices = @transform_2, window_bounds = array<i64: 8, 128>}, {transform_indices = @transform_3, window_bounds = array<i64: 1, 1>}]} {
    %c0 = arith.constant 0 : index
    %c0_0 = arith.constant 0 : index
    %0 = vector.load %arg1[%c0, %c0_0] : memref<8x128xf32, #tpu.memory_space<vmem>>, vector<8x128xf32>
    %c0_1 = arith.constant 0 : index
    %c0_2 = arith.constant 0 : index
    %1 = vector.load %arg2[%c0_1, %c0_2] : memref<8x128xf32, #tpu.memory_space<vmem>>, vector<8x128xf32>
    %c0_3 = arith.constant 0 : index
    %c0_4 = arith.constant 0 : index
    %2 = vector.load %arg3[%c0_3, %c0_4] : memref<8x128xf32, #tpu.memory_space<vmem>>, vector<8x128xf32>
    %3 = arith.addf %0, %1 : vector<8x128xf32>
    %cst = arith.constant 9.99999997E-7 : f32
    %4 = vector.broadcast %cst : f32 to vector<8x128xf32>
    %5 = arith.addf %3, %4 : vector<8x128xf32>
    %6 = arith.divf %1, %5 : vector<8x128xf32>
    %7 = math.log %6 : vector<8x128xf32>
    %cst_5 = arith.constant -1.000000e+02 : f32
    %8 = vector.broadcast %cst_5 : f32 to vector<8x128xf32>
    %9 = arith.maximumf %7, %8 : vector<8x128xf32>
    %cst_6 = arith.constant 1.000000e+00 : f32
    %10 = vector.broadcast %cst_6 : f32 to vector<8x128xf32>
    %11 = arith.subf %10, %6 : vector<8x128xf32>
    %12 = math.log %11 : vector<8x128xf32>
    %cst_7 = arith.constant -1.000000e+02 : f32
    %13 = vector.broadcast %cst_7 : f32 to vector<8x128xf32>
    %14 = arith.maximumf %12, %13 : vector<8x128xf32>
    %15 = arith.mulf %2, %9 : vector<8x128xf32>
    %cst_8 = arith.constant 1.000000e+00 : f32
    %16 = vector.broadcast %cst_8 : f32 to vector<8x128xf32>
    %17 = arith.subf %16, %2 : vector<8x128xf32>
    %18 = arith.mulf %17, %14 : vector<8x128xf32>
    %19 = arith.addf %15, %18 : vector<8x128xf32>
    %cst_9 = arith.constant 0.000000e+00 : f32
    %20 = vector.broadcast %cst_9 : f32 to vector<8x128xf32>
    %21 = arith.subf %20, %19 : vector<8x128xf32>
    %22 = vector.shape_cast %21 : vector<8x128xf32> to vector<1x8x128xf32>
    %cst_10 = arith.constant dense<0.000000e+00> : vector<1xf32>
    %23 = vector.multi_reduction <add>, %22, %cst_10 [1, 2] : vector<1x8x128xf32> to vector<1xf32>
    %24 = vector.shape_cast %23 : vector<1xf32> to vector<1x1x1xf32>
    %25 = vector.extract %24[0, 0, 0] : f32 from vector<1x1x1xf32>
    %26 = vector.broadcast %25 : f32 to vector<1x1xf32>
    %c0_11 = arith.constant 0 : index
    %c0_12 = arith.constant 0 : index
    %27 = vector.load %arg4[%c0_11, %c0_12] : memref<1x1xf32, #tpu.memory_space<vmem>>, vector<1x1xf32>
    tpu.vector_store %arg4[%c0_11, %c0_12], %26 {strides = array<i32>} : memref<1x1xf32, #tpu.memory_space<vmem>>, vector<1x1xf32>,
    return
  }
  func.func @transform_0(%arg0: i32) -> (i32, i32) {
    %c0_i32 = arith.constant 0 : i32
    %c0_i32_0 = arith.constant 0 : i32
    return %arg0, %c0_i32 : i32, i32
  }
  func.func @transform_1(%arg0: i32) -> (i32, i32) {
    %c0_i32 = arith.constant 0 : i32
    %c0_i32_0 = arith.constant 0 : i32
    return %arg0, %c0_i32 : i32, i32
  }
  func.func @transform_2(%arg0: i32) -> (i32, i32) {
    %c0_i32 = arith.constant 0 : i32
    %c0_i32_0 = arith.constant 0 : i32
    return %arg0, %c0_i32 : i32, i32
  }
  func.func @transform_3(%arg0: i32) -> (i32, i32) {
    %c0_i32 = arith.constant 0 : i32
    %c0_i32_0 = arith.constant 0 : i32
    return %arg0, %c0_i32 : i32, i32
  }
}

</mosaic_0001>

<llo_original>
// kernel: tpu_custom_call.1
$region0: #{tpu_custom_call.1}
  #allocation0 [shape = 'u32[]', space=smem, size = 0x4, offset = 0x4, fixed_abs, tag = 'smem constant byte address 0x4 - core index']
  #allocation1 [shape = 'u32[144,128]{1,0:T(1,128)}', space=vmem, size = 0x12000, scoped, tag = 'internal scratch']
  %s0 = inlined_call_operand.hbm [shape: f32[8,128], index: 0, kind: input, shape index: {}]
  %s1 = inlined_call_operand.hbm [shape: f32[8,128], index: 1, kind: input, shape index: {}]
  %s2 = inlined_call_operand.hbm [shape: f32[8,128], index: 2, kind: input, shape index: {}]
  %s3 = inlined_call_operand.hbm [shape: f32[1,1], index: 3, kind: output, shape index: {}]
  %s4 = sld [smem:[#allocation0]]
  $region34: #{tpu_custom_call.1} parent=0
    _
  %s6 = ssub.s32 1, %s4
  %s7 = scalar_select 0, %s6, %s4
  $region1: #{tpu_custom_call.1} parent=0
    #allocation2 [shape = 'u8[4096]{0}', space=vmem, size = 0x1000, scoped, tag = 'input window, operand 0, single buffered']
    #allocation3 [shape = 's32[1]{0}', space=sflag, size = 0x4, scoped, tag = 'scoped memory for tpu_custom_call.1']
    #allocation4 [shape = 's32[1]{0}', space=sflag, size = 0x4, scoped, tag = 'scoped memory for tpu_custom_call.1']
    #allocation5 [shape = 'u8[4096]{0}', space=vmem, size = 0x1000, scoped, tag = 'input window, operand 1, single buffered']
    #allocation6 [shape = 's32[1]{0}', space=sflag, size = 0x4, scoped, tag = 'scoped memory for tpu_custom_call.1']
    #allocation7 [shape = 'u8[4096]{0}', space=vmem, size = 0x1000, scoped, tag = 'input window, operand 2, single buffered']
    #allocation8 [shape = 'u8[512]{0}', space=vmem, size = 0x400, scoped, tag = 'output window, operand 0, single buffered']
    %8 = vsyncpa [#allocation3], 0
    %9 = vsyncpa [#allocation6], 0
    %10 = vsyncpa [#allocation4], 0
    // Predicated region
    $region2: #{tpu_custom_call.1} parent=1 // pred_check
      _
    $region3: #{tpu_custom_call.1} parent=1 // pred_check_branch
      %12 = sbr.rel (0) target = $region5
    $region4: #{tpu_custom_call.1} parent=1 // pred_region
      %s14 = ssub.s32 128, 128
      %15 = vsyncadd [#allocation3], %s14
      %s17 = sshll.u32 [#allocation2], 4
      %s18 = int_to_ptr.vmem [resolvable:$true] %s17
      %20 = dma.hbm_to_vmem [thread:$0]  %s0, 128, %s18, [#allocation3]
    $region5: #{tpu_custom_call.1} parent=1 // pred_fallthru
      _
    // Predicated region
    $region6: #{tpu_custom_call.1} parent=1 // pred_check
      _
    $region7: #{tpu_custom_call.1} parent=1 // pred_check_branch
      %22 = sbr.rel (0) target = $region9
    $region8: #{tpu_custom_call.1} parent=1 // pred_region
      %s24 = ssub.s32 128, 128
      %25 = vsyncadd [#allocation6], %s24
      %s27 = sshll.u32 [#allocation5], 4
      %s28 = int_to_ptr.vmem [resolvable:$true] %s27
      %30 = dma.hbm_to_vmem [thread:$0]  %s1, 128, %s28, [#allocation6]
    $region9: #{tpu_custom_call.1} parent=1 // pred_fallthru
      _
    // Predicated region
    $region10: #{tpu_custom_call.1} parent=1 // pred_check
      _
    $region11: #{tpu_custom_call.1} parent=1 // pred_check_branch
      %32 = sbr.rel (0) target = $region13
    $region12: #{tpu_custom_call.1} parent=1 // pred_region
      %s34 = ssub.s32 128, 128
      %35 = vsyncadd [#allocation6], %s34
      %s37 = sshll.u32 [#allocation7], 4
      %s38 = int_to_ptr.vmem [resolvable:$true] %s37
      %40 = dma.hbm_to_vmem [thread:$0]  %s2, 128, %s38, [#allocation6]
    $region13: #{tpu_custom_call.1} parent=1 // pred_fallthru
      _
    // Predicated region
    $region14: #{tpu_custom_call.1} parent=1 // pred_check
      _
    $region15: #{tpu_custom_call.1} parent=1 // pred_check_branch
      %42 = sbr.rel (0) target = $region17
    $region16: #{tpu_custom_call.1} parent=1 // pred_region
      %43 = dma.done [#allocation3], 128
    $region17: #{tpu_custom_call.1} parent=1 // pred_fallthru
      _
    // Predicated region
    $region18: #{tpu_custom_call.1} parent=1 // pred_check
      _
    $region19: #{tpu_custom_call.1} parent=1 // pred_check_branch
      %45 = sbr.rel (0) target = $region21
    $region20: #{tpu_custom_call.1} parent=1 // pred_region
      %46 = dma.done [#allocation6], 128
    $region21: #{tpu_custom_call.1} parent=1 // pred_fallthru
      _
    // Predicated region
    $region22: #{tpu_custom_call.1} parent=1 // pred_check
      _
    $region23: #{tpu_custom_call.1} parent=1 // pred_check_branch
      %48 = sbr.rel (0) target = $region25
    $region24: #{tpu_custom_call.1} parent=1 // pred_region
      %49 = dma.done [#allocation6], 128
    $region25: #{tpu_custom_call.1} parent=1 // pred_fallthru
      _
    %v50 = vld [vmem:[#allocation2] sm:$0xff]
    %v51 = vld [vmem:[#allocation5] sm:$0xff]
    %v52 = vld [vmem:[#allocation7] sm:$0xff]
    %v53 = vadd.f32 %v50, %v51
    %v54 = vadd.f32 %v53, 1e-06
    %v55 = vrcp.pop %v54
    %v56 = vmul.f32 %v51, %v55
    %v57 = vlog2.pop %v56
    %v58 = vmul.f32 %v57, 0.6931472
    %v59 = vmax.f32 %v58, -100.0
    %v60 = vsub.f32 1.0, %v56
    %v61 = vlog2.pop %v60
    %v62 = vmul.f32 %v61, 0.6931472
    %v63 = vmax.f32 %v62, -100.0
    %v64 = vmul.f32 %v52, %v59
    %v65 = vsub.f32 1.0, %v52
    %v66 = vmul.f32 %v65, %v63
    %v67 = vadd.f32 %v64, %v66
    %v68 = vsub.f32 0.0, %v67
    %69 = vadd.xlane.f32.xlu0 %v68
    %v70 = vpop.xlane.xlu0 %69
    %v71 = vrot.slane %v70, 4
    %v72 = vadd.f32 %v70, %v71
    %v73 = vrot.slane %v72, 2
    %v74 = vadd.f32 %v72, %v73
    %v75 = vrot.slane %v74, 1
    %v76 = vadd.f32 %v74, %v75
    %s77 = vtos %v76
    %v78 = vstv %s77
    %vm79 = vcmask 0
    %80 = vst.msk [vmem:[#allocation8] sm:$0x1] %vm79, %v78
    // Predicated region
    $region26: #{tpu_custom_call.1} parent=1 // pred_check
      _
    $region27: #{tpu_custom_call.1} parent=1 // pred_check_branch
      %82 = sbr.rel (0) target = $region29
    $region28: #{tpu_custom_call.1} parent=1 // pred_region
      %s84 = ssub.s32 16, 16
      %85 = vsyncadd [#allocation4], %s84
      %s87 = sshll.u32 [#allocation8], 4
      %s88 = int_to_ptr.vmem [resolvable:$true] %s87
      %90 = dma.vmem_to_hbm [thread:$0]  %s88, 16, %s3, [#allocation4]
    $region29: #{tpu_custom_call.1} parent=1 // pred_fallthru
      _
    // Predicated region
    $region30: #{tpu_custom_call.1} parent=1 // pred_check
      _
    $region31: #{tpu_custom_call.1} parent=1 // pred_check_branch
      %92 = sbr.rel (0) target = $region33
    $region32: #{tpu_custom_call.1} parent=1 // pred_region
      %93 = dma.done [#allocation4], 16
    $region33: #{tpu_custom_call.1} parent=1 // pred_fallthru
      _
    %94 = vsyncpa [#allocation3], 1
    %95 = vsyncpa [#allocation6], 1
    %96 = vsyncpa [#allocation4], 1

</llo_original>
